<compile_context>
chip_gen: v7x
topology: tpu7x:2x2x1
jax: 0.10.0
libtpu: 0.0.40
codegen_flags: <defaults>
</compile_context>

<pallas_src>
import jax
import jax.numpy as jnp
from jax.experimental import pallas as pl
from jax.experimental.pallas import tpu as pltpu


def _agca_kernel(x_ref, w1t_ref, a2_ref, w4t_ref, scal_ref, o_ref):
    # x block: (Bt, C_in, HW_pad) in the caller's dtype (f32 or bf16).
    x = x_ref[...]

    inv_hw = scal_ref[0]          # 1 / (H*W)  -- true, un-padded spatial size
    w2 = scal_ref[1]              # conv2 scalar weight (Conv1d 1->1, k=1)
    w3 = scal_ref[2]              # conv3 scalar weight

    # AdaptiveAvgPool2d(1): f32-accumulated lane reduce over (zero-padded) HW.
    m = jnp.sum(x, axis=2, dtype=jnp.float32) * inv_hw            # (Bt, C_in)

    # conv1 (1x1, no bias): (Bt, C_in) @ (C_in, hide) -> (Bt, hide)
    y = jnp.dot(m, w1t_ref[...], preferred_element_type=jnp.float32)

    # conv2 scalar scale + softmax over the hide axis (PyTorch Softmax(dim=2)).
    s = w2 * y
    s = s - jnp.max(s, axis=-1, keepdims=True)
    e = jnp.exp(s)
    a1 = e / jnp.sum(e, axis=-1, keepdims=True)                   # (Bt, hide)

    # y @ A  with  A = diag(a1) + A2   ==   a1 * y + y @ A2
    z = a1 * y + jnp.dot(y, a2_ref[...], preferred_element_type=jnp.float32)

    # conv3 scalar scale + ReLU.
    z = jnp.maximum(w3 * z, 0.0)                                  # (Bt, hide)

    # conv4 (1x1, no bias) + sigmoid -> per-(batch, channel) gate.
    g = jax.nn.sigmoid(
        jnp.dot(z, w4t_ref[...], preferred_element_type=jnp.float32))  # (Bt, C_in)

    # Channel gate broadcast over the spatial lanes; output keeps x's dtype.
    o_ref[...] = x * g.astype(x.dtype)[:, :, None]


def agca_forward(x, w1, a2, w2, w3, w4, *, vmem_tile_budget=24 * 1024 * 1024):
    """AGCA forward.  x: (B, C_in, H, W); returns same shape and dtype.

    w1: (hide, C_in) conv1 weight, a2: (hide, hide) A2 parameter,
    w2 / w3: scalar Conv1d(1,1,k=1) weights, w4: (C_in, hide) conv4 weight.
    """
    B, C_in, H, W = x.shape
    hide = w1.shape[0]
    HW = H * W
    HW_pad = ((HW + 127) // 128) * 128

    x3 = x.reshape(B, C_in, HW)
    if HW_pad != HW:
        # Zero padding keeps sum-based means exact and output lanes lane-dense.
        x3 = jnp.pad(x3, ((0, 0), (0, 0), (0, HW_pad - HW)))

    itemsize = jnp.dtype(x.dtype).itemsize
    bytes_per_batch = C_in * HW_pad * itemsize

    # Batch tile: largest Bt whose double-buffered in+out slabs fit the VMEM
    # budget, that divides B, and (when possible) still leaves >= 2 parallel
    # grid steps so both v7x TensorCores get work.
    bt = max(1, min(B, vmem_tile_budget // (4 * bytes_per_batch)))
    if B >= 2:
        bt = min(bt, max(1, B // 2))
    while B % bt:
        bt -= 1
    # TODO(synk): for very large C_in*HW slabs (bt==1 still over budget) add an
    # HW-tiled two-pass path (mean/gate pass + tiled gate-apply pass).

    w1t = jnp.asarray(w1, jnp.float32).T               # (C_in, hide)
    a2f = jnp.asarray(a2, jnp.float32)                 # (hide, hide)
    w4t = jnp.asarray(w4, jnp.float32).T               # (hide, C_in)
    scal = jnp.stack([
        jnp.float32(1.0 / HW),
        jnp.asarray(w2, jnp.float32).reshape(()),
        jnp.asarray(w3, jnp.float32).reshape(()),
    ]).astype(jnp.float32)                             # (3,) SMEM scalars

    weight_bytes = 4 * (w1t.size + a2f.size + w4t.size)
    vmem_limit = int(min(
        max(4 * bt * bytes_per_batch + weight_bytes + (4 << 20), 16 << 20),
        48 << 20))

    cost = pl.CostEstimate(
        flops=2 * B * C_in * HW_pad + 2 * B * (2 * C_in * hide + hide * hide),
        transcendentals=B * (hide + C_in),
        bytes_accessed=2 * B * C_in * HW_pad * itemsize,
    )

    out = pl.pallas_call(
        _agca_kernel,
        out_shape=jax.ShapeDtypeStruct((B, C_in, HW_pad), x.dtype),
        grid_spec=pltpu.PrefetchScalarGridSpec(
            num_scalar_prefetch=0,
            grid=(B // bt,),
            in_specs=[
                pl.BlockSpec((bt, C_in, HW_pad), lambda b: (b, 0, 0)),  # x
                pl.BlockSpec((C_in, hide), lambda b: (0, 0)),           # conv1^T
                pl.BlockSpec((hide, hide), lambda b: (0, 0)),           # A2
                pl.BlockSpec((hide, C_in), lambda b: (0, 0)),           # conv4^T
                pl.BlockSpec(memory_space=pltpu.MemorySpace.SMEM),      # scalars
            ],
            out_specs=pl.BlockSpec((bt, C_in, HW_pad), lambda b: (b, 0, 0)),
        ),
        compiler_params=pltpu.CompilerParams(
            dimension_semantics=("parallel",),
            vmem_limit_bytes=vmem_limit),
        cost_estimate=cost,
    )(x3, w1t, a2f, w4t, scal)

    if HW_pad != HW:
        out = out[:, :, :HW]
    return out.reshape(B, C_in, H, W)


def agca_ref(x, w1, a2, w2, w3, w4):
    """Pure-JAX reference mirroring the PyTorch forward exactly (f32 math)."""
    hide = w1.shape[0]
    xf = x.astype(jnp.float32)
    m = xf.mean(axis=(2, 3))                                 # avg_pool -> (B, C_in)
    y = m @ w1.T                                             # conv1    -> (B, hide)
    a1 = jax.nn.softmax(w2 * y, axis=-1)                     # conv2 + softmax(dim=2)
    A = jnp.eye(hide, dtype=jnp.float32) * a1[:, None, :] + a2
    y2 = jnp.einsum("bh,bhk->bk", y, A)                      # y @ A
    y3 = jnp.maximum(w3 * y2, 0.0)                           # relu(conv3)
    g = jax.nn.sigmoid(y3 @ w4.T)                            # sigmoid(conv4)
    return (xf * g[:, :, None, None]).astype(x.dtype)


if __name__ == "__main__":
    key = jax.random.PRNGKey(0)
    kx, k1, k2, k3, k4 = jax.random.split(key, 5)

    # HW = 14*14 = 196 deliberately exercises the lane-padding (-> 256) path.
    B, C_in, H, W = 2, 16, 14, 14
    ratio = 4
    hide = C_in // ratio

    x = jax.random.normal(kx, (B, C_in, H, W), dtype=jnp.float32)

    # Deterministic synthetic parameters (shapes from AGCA.__init__):
    w1 = jax.random.normal(k1, (hide, C_in), dtype=jnp.float32) * 0.1   # conv1
    a2 = jnp.full((hide, hide), 1e-6, dtype=jnp.float32)                # A2
    w2 = jax.random.normal(k2, (), dtype=jnp.float32) * 0.5             # conv2 (1,1,1)
    w3 = jax.random.normal(k3, (), dtype=jnp.float32) * 0.5             # conv3 (1,1,1)
    w4 = jax.random.normal(k4, (C_in, hide), dtype=jnp.float32) * 0.1   # conv4

    # f32 path
    out = jax.block_until_ready(agca_forward(x, w1, a2, w2, w3, w4))
    ref = agca_ref(x, w1, a2, w2, w3, w4)
    assert out.shape == x.shape and out.dtype == x.dtype
    err = float(jnp.max(jnp.abs(out - ref)))
    assert jnp.allclose(out, ref, atol=1e-5, rtol=1e-5), "max abs err = %g" % err

    # bf16 I/O path (gate math stays f32 inside the kernel).
    xb = x.astype(jnp.bfloat16)
    outb = jax.block_until_ready(agca_forward(xb, w1, a2, w2, w3, w4))
    refb = agca_ref(xb, w1, a2, w2, w3, w4)
    assert outb.shape == xb.shape and outb.dtype == jnp.bfloat16
    errb = float(jnp.max(jnp.abs(outb.astype(jnp.float32)
                                 - refb.astype(jnp.float32))))
    assert errb < 5e-2, "bf16 max abs err = %g" % errb

    print("KERNEL_OK")
</pallas_src>

<mosaic_0001>
module attributes {stable_mosaic.version = 11 : i64} {
  func.func @_agca_kernel(%arg0: i32, %arg1: memref<1x16x256xf32, #tpu.memory_space<vmem>>, %arg2: memref<16x4xf32, #tpu.memory_space<vmem>>, %arg3: memref<4x4xf32, #tpu.memory_space<vmem>>, %arg4: memref<4x16xf32, #tpu.memory_space<vmem>>, %arg5: memref<3xf32, #tpu.memory_space<smem>>, %arg6: memref<1x16x256xf32, #tpu.memory_space<vmem>>) attributes {dimension_semantics = [#tpu.dimension_semantics<parallel>], iteration_bounds = array<i64: 2>, scalar_prefetch = 0 : i64, scratch_operands = 0 : i64, tpu.core_type = #tpu.core_type<tc>, window_params = [{transform_indices = @transform_0, window_bounds = array<i64: 1, 16, 256>}, {pipeline_mode = #tpu.pipeline_mode<synchronous>, transform_indices = @transform_1, window_bounds = array<i64: 16, 4>}, {pipeline_mode = #tpu.pipeline_mode<synchronous>, transform_indices = @transform_2, window_bounds = array<i64: 4, 4>}, {pipeline_mode = #tpu.pipeline_mode<synchronous>, transform_indices = @transform_3, window_bounds = array<i64: 4, 16>}, {transform_indices = @transform_4, window_bounds = array<i64: 3>}, {transform_indices = @transform_5, window_bounds = array<i64: 1, 16, 256>}]} {
    %c0 = arith.constant 0 : index
    %c0_0 = arith.constant 0 : index
    %c0_1 = arith.constant 0 : index
    %0 = vector.load %arg1[%c0, %c0_0, %c0_1] : memref<1x16x256xf32, #tpu.memory_space<vmem>>, vector<1x16x256xf32>
    %c0_2 = arith.constant 0 : index
    %1 = memref.load %arg5[%c0_2] : memref<3xf32, #tpu.memory_space<smem>>
    %c1 = arith.constant 1 : index
    %2 = memref.load %arg5[%c1] : memref<3xf32, #tpu.memory_space<smem>>
    %c2 = arith.constant 2 : index
    %3 = memref.load %arg5[%c2] : memref<3xf32, #tpu.memory_space<smem>>
    %cst = arith.constant dense<0.000000e+00> : vector<1x16xf32>
    %4 = vector.multi_reduction <add>, %0, %cst [2] : vector<1x16x256xf32> to vector<1x16xf32>
    %5 = vector.broadcast %1 : f32 to vector<1x16xf32>
    %6 = arith.mulf %4, %5 : vector<1x16xf32>
    %c0_3 = arith.constant 0 : index
    %c0_4 = arith.constant 0 : index
    %7 = vector.load %arg2[%c0_3, %c0_4] : memref<16x4xf32, #tpu.memory_space<vmem>>, vector<16x4xf32>
    %cst_5 = arith.constant dense<0.000000e+00> : vector<1x4xf32>
    %8 = tpu.matmul %6, %7, %cst_5 {dimension_numbers = #tpu.dot_dimension_numbers<[1], [0], [0], [1], [0, 0, 1, 1], [], []>} : vector<1x16xf32>, vector<16x4xf32>, vector<1x4xf32> -> vector<1x4xf32>
    %9 = vector.broadcast %2 : f32 to vector<1x4xf32>
    %10 = arith.mulf %9, %8 : vector<1x4xf32>
    %cst_6 = arith.constant dense<0xFF800000> : vector<1xf32>
    %11 = vector.multi_reduction <maximumf>, %10, %cst_6 [1] : vector<1x4xf32> to vector<1xf32>
    %12 = vector.shape_cast %11 : vector<1xf32> to vector<1x1xf32>
    %13 = vector.broadcast %12 : vector<1x1xf32> to vector<1x4xf32>
    %14 = arith.subf %10, %13 : vector<1x4xf32>
    %15 = math.exp %14 : vector<1x4xf32>
    %cst_7 = arith.constant dense<0.000000e+00> : vector<1xf32>
    %16 = vector.multi_reduction <add>, %15, %cst_7 [1] : vector<1x4xf32> to vector<1xf32>
    %17 = vector.shape_cast %16 : vector<1xf32> to vector<1x1xf32>
    %18 = vector.broadcast %17 : vector<1x1xf32> to vector<1x4xf32>
    %19 = arith.divf %15, %18 : vector<1x4xf32>
    %20 = arith.mulf %19, %8 : vector<1x4xf32>
    %c0_8 = arith.constant 0 : index
    %c0_9 = arith.constant 0 : index
    %21 = vector.load %arg3[%c0_8, %c0_9] : memref<4x4xf32, #tpu.memory_space<vmem>>, vector<4x4xf32>
    %cst_10 = arith.constant dense<0.000000e+00> : vector<1x4xf32>
    %22 = tpu.matmul %8, %21, %cst_10 {dimension_numbers = #tpu.dot_dimension_numbers<[1], [0], [0], [1], [0, 0, 1, 1], [], []>} : vector<1x4xf32>, vector<4x4xf32>, vector<1x4xf32> -> vector<1x4xf32>
    %23 = arith.addf %20, %22 : vector<1x4xf32>
    %24 = vector.broadcast %3 : f32 to vector<1x4xf32>
    %25 = arith.mulf %24, %23 : vector<1x4xf32>
    %cst_11 = arith.constant 0.000000e+00 : f32
    %26 = vector.broadcast %cst_11 : f32 to vector<1x4xf32>
    %27 = arith.maximumf %25, %26 : vector<1x4xf32>
    %c0_12 = arith.constant 0 : index
    %c0_13 = arith.constant 0 : index
    %28 = vector.load %arg4[%c0_12, %c0_13] : memref<4x16xf32, #tpu.memory_space<vmem>>, vector<4x16xf32>
    %cst_14 = arith.constant dense<0.000000e+00> : vector<1x16xf32>
    %29 = tpu.matmul %27, %28, %cst_14 {dimension_numbers = #tpu.dot_dimension_numbers<[1], [0], [0], [1], [0, 0, 1, 1], [], []>} : vector<1x4xf32>, vector<4x16xf32>, vector<1x16xf32> -> vector<1x16xf32>
    %30 = arith.negf %29 : vector<1x16xf32>
    %31 = math.exp %30 : vector<1x16xf32>
    %cst_15 = arith.constant 1.000000e+00 : f32
    %32 = vector.broadcast %cst_15 : f32 to vector<1x16xf32>
    %33 = arith.addf %32, %31 : vector<1x16xf32>
    %34 = arith.divf %32, %33 : vector<1x16xf32>
    %35 = vector.shape_cast %34 : vector<1x16xf32> to vector<1x16x1xf32>
    %36 = vector.broadcast %35 : vector<1x16x1xf32> to vector<1x16x256xf32>
    %37 = arith.mulf %0, %36 : vector<1x16x256xf32>
    %c0_16 = arith.constant 0 : index
    %c0_17 = arith.constant 0 : index
    %c0_18 = arith.constant 0 : index
    %38 = vector.load %arg6[%c0_16, %c0_17, %c0_18] : memref<1x16x256xf32, #tpu.memory_space<vmem>>, vector<1x16x256xf32>
    tpu.vector_store %arg6[%c0_16, %c0_17, %c0_18], %37 {strides = array<i32>} : memref<1x16x256xf32, #tpu.memory_space<vmem>>, vector<1x16x256xf32>,
    return
  }
  func.func @transform_0(%arg0: i32) -> (i32, i32, i32) {
    %c0_i32 = arith.constant 0 : i32
    %c0_i32_0 = arith.constant 0 : i32
    %c0_i32_1 = arith.constant 0 : i32
    return %arg0, %c0_i32, %c0_i32_0 : i32, i32, i32
  }
  func.func @transform_1(%arg0: i32) -> (i32, i32) {
    %c0_i32 = arith.constant 0 : i32
    %c0_i32_0 = arith.constant 0 : i32
    %c0_i32_1 = arith.constant 0 : i32
    return %c0_i32, %c0_i32_0 : i32, i32
  }
  func.func @transform_2(%arg0: i32) -> (i32, i32) {
    %c0_i32 = arith.constant 0 : i32
    %c0_i32_0 = arith.constant 0 : i32
    %c0_i32_1 = arith.constant 0 : i32
    return %c0_i32, %c0_i32_0 : i32, i32
  }
  func.func @transform_3(%arg0: i32) -> (i32, i32) {
    %c0_i32 = arith.constant 0 : i32
    %c0_i32_0 = arith.constant 0 : i32
    %c0_i32_1 = arith.constant 0 : i32
    return %c0_i32, %c0_i32_0 : i32, i32
  }
  func.func @transform_4(%arg0: i32) -> i32 {
    %c0_i32 = arith.constant 0 : i32
    %c0_i32_0 = arith.constant 0 : i32
    return %c0_i32 : i32
  }
  func.func @transform_5(%arg0: i32) -> (i32, i32, i32) {
    %c0_i32 = arith.constant 0 : i32
    %c0_i32_0 = arith.constant 0 : i32
    %c0_i32_1 = arith.constant 0 : i32
    return %arg0, %c0_i32, %c0_i32_0 : i32, i32, i32
  }
}

</mosaic_0001>

<llo_original>
// kernel: tpu_custom_call.1
$region0: #{tpu_custom_call.1}
  #allocation0 [shape = 'u32[]', space=smem, size = 0x4, offset = 0x4, fixed_abs, tag = 'smem constant byte address 0x4 - core index']
  #allocation1 [shape = 'u32[144,128]{1,0:T(1,128)}', space=vmem, size = 0x12000, scoped, tag = 'internal scratch']
  %s0 = inlined_call_operand.hbm [shape: f32[2,16,256], index: 0, kind: input, shape index: {}]
  %s1 = inlined_call_operand.vmem [shape: f32[16,4], index: 1, kind: input, shape index: {}]
  %s2 = inlined_call_operand.vmem [shape: f32[4,4], index: 2, kind: input, shape index: {}]
  %s3 = inlined_call_operand.vmem [shape: f32[4,16], index: 3, kind: input, shape index: {}]
  %s4 = inlined_call_operand.vmem [shape: f32[3], index: 4, kind: input, shape index: {}]
  %s5 = inlined_call_operand.hbm [shape: f32[2,16,256], index: 5, kind: output, shape index: {}]
  %s6 = sld [smem:[#allocation0]]
  $region61: #{tpu_custom_call.1} parent=0
    _
  %s8 = ssub.s32 1, %s6
  %s9 = scalar_select 0, %s8, %s6
  $region1: #{tpu_custom_call.1} parent=0
    #allocation2 [shape = 'u8[32768]{0}', space=vmem, size = 0x8000, scoped, tag = 'input window, operand 0']
    #allocation3 [shape = 's32[2]{0}', space=sflag, size = 0x8, scoped, tag = 'scoped memory for tpu_custom_call.1']
    #allocation4 [shape = 's32[2]{0}', space=sflag, size = 0x8, scoped, tag = 'scoped memory for tpu_custom_call.1']
    #allocation5 [shape = 's32[2]{0}', space=sflag, size = 0x8, scoped, tag = 'scoped memory for tpu_custom_call.1']
    #allocation6 [shape = 'u8[512]{0}', space=smem, size = 0x200, scoped, tag = 'input window, operand 4, single buffered']
    #allocation7 [shape = 'u8[32768]{0}', space=vmem, size = 0x8000, scoped, tag = 'output window, operand 0']
    %10 = vsyncpa [#allocation3], 0
    %s11 = scalar_lea.sflag [#allocation3], 1
    %12 = vsyncpa %s11, 0
    %13 = vsyncpa [#allocation5], 0
    %14 = vsyncpa [#allocation4], 0
    %s15 = scalar_lea.sflag [#allocation4], 1
    %16 = vsyncpa %s15, 0
    loop: start=0, step=1, limit=4
    $region2: #{tpu_custom_call.1} parent=1 // loop_pre_header
      _
    $region3: #{tpu_custom_call.1} parent=1 // loop_header
      %s18 = sphi 0, %s22
      %p19 = scmp.ge.s32.totalorder %s18, 4
      %s28 = sphi 0, %s30
      %s31 = sphi 0, %s28
      %s32 = sphi 0, %s31
      %s48 = sphi 0, %s32
      %s52 = sphi 0, %s52
      %s54 = sphi 0, %s52
      %s55 = sphi 0, %s54
      %s69 = sphi 0, %s55
      %s73 = sphi 0, %s73
      %s75 = sphi 0, %s73
      %s76 = sphi 0, %s75
      %s90 = sphi 0, %s76
      %s94 = sphi 0, %s94
      %s96 = sphi 0, %s94
      %s97 = sphi 0, %s96
      %s111 = sphi 0, %s97
      %s115 = sphi 0, %s115
      %s117 = sphi 0, %s115
      %s118 = sphi 0, %s117
      %s132 = sphi 0, %s118
      %s138 = sphi 0, %s140
      %s141 = sphi 0, %s138
      %s142 = sphi 0, %s141
      %s158 = sphi 0, %s142
    $region4: #{tpu_custom_call.1} parent=1 // loop_header_branch
      %21 = sbr.rel (%p19) target = $region8
    $region5: #{tpu_custom_call.1} parent=1 // loop_body
      %s23 = ssub.s32 %s18, 1
      %s24 = ssub.s32 %s18, 2
      %s25 = sadd.s32 %s18, 1
      %s26 = ssub.s32 %s18, %s25
      %p27 = scmp.eq.s32.totalorder %s26, 0
      %s29 = sadd.s32 %s28, 1
      %s30 = scalar_select %p27, %s28, %s29
      %p33 = pneg %p27
      %p34 = scmp.eq.s32.totalorder %s18, 1
      %p35 = por %p33, %p34
      %p36 = scmp.ne.s32.totalorder %s28, %s31
      %p37 = scmp.eq.s32.totalorder %s18, 0
      %p38 = por %p36, %p37
      %p39 = scmp.ne.s32.totalorder %s28, %s31
      %p40 = scmp.eq.s32.totalorder %s23, 1
      %p41 = por %p39, %p40
      %p42 = scmp.ne.s32.totalorder %s31, %s32
      %p43 = scmp.eq.s32.totalorder %s23, 0
      %p44 = por %p42, %p43
      %p45 = scmp.ne.s32.totalorder %s31, %s32
      %p46 = scmp.eq.s32.totalorder %s24, 1
      %p47 = por %p45, %p46
      %p49 = scmp.ne.s32.totalorder %s32, %s48
      %p50 = scmp.eq.s32.totalorder %s24, 0
      %p51 = por %p49, %p50
      %s53 = sadd.s32 %s52, 1
      %p56 = scmp.eq.s32.totalorder %s18, 1
      %p57 = scmp.ne.s32.totalorder %s52, %s54
      %p58 = scmp.eq.s32.totalorder %s18, 0
      %p59 = por %p57, %p58
      %p60 = scmp.ne.s32.totalorder %s52, %s54
      %p61 = scmp.eq.s32.totalorder %s23, 1
      %p62 = por %p60, %p61
      %p63 = scmp.ne.s32.totalorder %s54, %s55
      %p64 = scmp.eq.s32.totalorder %s23, 0
      %p65 = por %p63, %p64
      %p66 = scmp.ne.s32.totalorder %s54, %s55
      %p67 = scmp.eq.s32.totalorder %s24, 1
      %p68 = por %p66, %p67
      %p70 = scmp.ne.s32.totalorder %s55, %s69
      %p71 = scmp.eq.s32.totalorder %s24, 0
      %p72 = por %p70, %p71
      %s74 = sadd.s32 %s73, 1
      %p77 = scmp.eq.s32.totalorder %s18, 1
      %p78 = scmp.ne.s32.totalorder %s73, %s75
      %p79 = scmp.eq.s32.totalorder %s18, 0
      %p80 = por %p78, %p79
      %p81 = scmp.ne.s32.totalorder %s73, %s75
      %p82 = scmp.eq.s32.totalorder %s23, 1
      %p83 = por %p81, %p82
      %p84 = scmp.ne.s32.totalorder %s75, %s76
      %p85 = scmp.eq.s32.totalorder %s23, 0
      %p86 = por %p84, %p85
      %p87 = scmp.ne.s32.totalorder %s75, %s76
      %p88 = scmp.eq.s32.totalorder %s24, 1
      %p89 = por %p87, %p88
      %p91 = scmp.ne.s32.totalorder %s76, %s90
      %p92 = scmp.eq.s32.totalorder %s24, 0
      %p93 = por %p91, %p92
      %s95 = sadd.s32 %s94, 1
      %p98 = scmp.eq.s32.totalorder %s18, 1
      %p99 = scmp.ne.s32.totalorder %s94, %s96
      %p100 = scmp.eq.s32.totalorder %s18, 0
      %p101 = por %p99, %p100
      %p102 = scmp.ne.s32.totalorder %s94, %s96
      %p103 = scmp.eq.s32.totalorder %s23, 1
      %p104 = por %p102, %p103
      %p105 = scmp.ne.s32.totalorder %s96, %s97
      %p106 = scmp.eq.s32.totalorder %s23, 0
      %p107 = por %p105, %p106
      %p108 = scmp.ne.s32.totalorder %s96, %s97
      %p109 = scmp.eq.s32.totalorder %s24, 1
      %p110 = por %p108, %p109
      %p112 = scmp.ne.s32.totalorder %s97, %s111
      %p113 = scmp.eq.s32.totalorder %s24, 0
      %p114 = por %p112, %p113
      %s116 = sadd.s32 %s115, 1
      %p119 = scmp.eq.s32.totalorder %s18, 1
      %p120 = scmp.ne.s32.totalorder %s115, %s117
      %p121 = scmp.eq.s32.totalorder %s18, 0
      %p122 = por %p120, %p121
      %p123 = scmp.ne.s32.totalorder %s115, %s117
      %p124 = scmp.eq.s32.totalorder %s23, 1
      %p125 = por %p123, %p124
      %p126 = scmp.ne.s32.totalorder %s117, %s118
      %p127 = scmp.eq.s32.totalorder %s23, 0
      %p128 = por %p126, %p127
      %p129 = scmp.ne.s32.totalorder %s117, %s118
      %p130 = scmp.eq.s32.totalorder %s24, 1
      %p131 = por %p129, %p130
      %p133 = scmp.ne.s32.totalorder %s118, %s132
      %p134 = scmp.eq.s32.totalorder %s24, 0
      %p135 = por %p133, %p134
      %s136 = ssub.s32 %s18, %s25
      %p137 = scmp.eq.s32.totalorder %s136, 0
      %s139 = sadd.s32 %s138, 1
      %s140 = scalar_select %p137, %s138, %s139
      %p143 = pneg %p137
      %p144 = scmp.eq.s32.totalorder %s18, 1
      %p145 = por %p143, %p144
      %p146 = scmp.ne.s32.totalorder %s138, %s141
      %p147 = scmp.eq.s32.totalorder %s18, 0
      %p148 = por %p146, %p147
      %p149 = scmp.ne.s32.totalorder %s138, %s141
      %p150 = scmp.eq.s32.totalorder %s23, 1
      %p151 = por %p149, %p150
      %p152 = scmp.ne.s32.totalorder %s141, %s142
      %p153 = scmp.eq.s32.totalorder %s23, 0
      %p154 = por %p152, %p153
      %p155 = scmp.ne.s32.totalorder %s141, %s142
      %p156 = scmp.eq.s32.totalorder %s24, 1
      %p157 = por %p155, %p156
      %p159 = scmp.ne.s32.totalorder %s142, %s158
      %p160 = scmp.eq.s32.totalorder %s24, 0
      %p161 = por %p159, %p160
      %p162 = scmp.le.s32.totalorder 1, %s18
      %p163 = scmp.lt.s32.totalorder %s18, 3
      %p164 = pnand %p162, %p163
      %p165 = pneg %p164
      // Predicated region
      $region9: #{tpu_custom_call.1} parent=5 // pred_check
        _
      $region10: #{tpu_custom_call.1} parent=5 // pred_check_branch
        %167 = sbr.rel (%p164) target = $region12
      $region11: #{tpu_custom_call.1} parent=5 // pred_region
        %s168 = ssub.s32 %s18, 1
        // Predicated region
        $region13: #{tpu_custom_call.1} parent=11 // pred_check
          %p169 = pneg %p65
        $region14: #{tpu_custom_call.1} parent=11 // pred_check_branch
          %171 = sbr.rel (%p169) target = $region16
        $region15: #{tpu_custom_call.1} parent=11 // pred_region
          _
        $region16: #{tpu_custom_call.1} parent=11 // pred_fallthru
          _
        // Predicated region
        $region17: #{tpu_custom_call.1} parent=11 // pred_check
          %p172 = pneg %p86
        $region18: #{tpu_custom_call.1} parent=11 // pred_check_branch
          %174 = sbr.rel (%p172) target = $region20
        $region19: #{tpu_custom_call.1} parent=11 // pred_region
          _
        $region20: #{tpu_custom_call.1} parent=11 // pred_fallthru
          _
        // Predicated region
        $region21: #{tpu_custom_call.1} parent=11 // pred_check
          %p175 = pneg %p107
        $region22: #{tpu_custom_call.1} parent=11 // pred_check_branch
          %177 = sbr.rel (%p175) target = $region24
        $region23: #{tpu_custom_call.1} parent=11 // pred_region
          _
        $region24: #{tpu_custom_call.1} parent=11 // pred_fallthru
          _
        // Predicated region
        $region25: #{tpu_custom_call.1} parent=11 // pred_check
          %p178 = pneg %p128
        $region26: #{tpu_custom_call.1} parent=11 // pred_check_branch
          %180 = sbr.rel (%p178) target = $region28
        $region27: #{tpu_custom_call.1} parent=11 // pred_region
          %s182 = ssub.s32 16, 16
          %183 = vsyncadd [#allocation5], %s182
          %s185 = sshll.u32 %s4, 4
          %s186 = int_to_ptr.vmem [resolvable:$true] %s185
          %188 = dma.vmem_to_smem %s186, 16, [#allocation6], [#allocation5]
        $region28: #{tpu_custom_call.1} parent=11 // pred_fallthru
          _
      $region12: #{tpu_custom_call.1} parent=5 // pred_fallthru
        _
      %p189 = scmp.lt.s32.totalorder %s18, 2
      // Predicated region
      $region29: #{tpu_custom_call.1} parent=5 // pred_check
        %p190 = pneg %p189
      $region30: #{tpu_custom_call.1} parent=5 // pred_check_branch
        %192 = sbr.rel (%p190) target = $region32
      $region31: #{tpu_custom_call.1} parent=5 // pred_region
        // Predicated region
        $region33: #{tpu_custom_call.1} parent=31 // pred_check
          %p193 = pneg %p38
        $region34: #{tpu_custom_call.1} parent=31 // pred_check_branch
          %195 = sbr.rel (%p193) target = $region36
        $region35: #{tpu_custom_call.1} parent=31 // pred_region
          %s196 = sand.u32 %s28, 1
          %s197 = scalar_lea.sflag [#allocation3], %s196
          %s198 = sand.u32 %s28, 1
          %s199 = smul.addr %s198, 32
          %s200 = scalar_lea.vmem [#allocation2], %s199
          %s202 = ssub.s32 512, 512
          %203 = vsyncadd %s197, %s202
          %s204 = smul.addr %s18, 4
          %s205 = smul.addr %s204, 128
          %s206 = scalar_lea.hbm %s0, %s205
          %s207 = sshll.u32 %s200, 4
          %s208 = int_to_ptr.vmem [resolvable:$true] %s207
          %213 = dma.hbm_to_vmem [thread:$0]  %s206, 512, %s208, %s197, 256, 256, 16
        $region36: #{tpu_custom_call.1} parent=31 // pred_fallthru
          _
      $region32: #{tpu_custom_call.1} parent=5 // pred_fallthru
        _
      %p214 = scmp.le.s32.totalorder 1, %s18
      %p215 = scmp.lt.s32.totalorder %s18, 3
      %p216 = pnand %p214, %p215
      %p217 = pneg %p216
      // Predicated region
      $region37: #{tpu_custom_call.1} parent=5 // pred_check
        _
      $region38: #{tpu_custom_call.1} parent=5 // pred_check_branch
        %219 = sbr.rel (%p216) target = $region40
      $region39: #{tpu_custom_call.1} parent=5 // pred_region
        %s220 = ssub.s32 %s18, 1
        %s221 = sand.u32 %s31, 1
        %s222 = scalar_lea.sflag [#allocation3], %s221
        %s223 = sand.u32 %s31, 1
        %s224 = smul.addr %s223, 32
        %s225 = scalar_lea.vmem [#allocation2], %s224
        // Predicated region
        $region41: #{tpu_custom_call.1} parent=39 // pred_check
          %p226 = pneg %p44
        $region42: #{tpu_custom_call.1} parent=39 // pred_check_branch
          %228 = sbr.rel (%p226) target = $region44
        $region43: #{tpu_custom_call.1} parent=39 // pred_region
          %229 = dma.done %s222, 512
        $region44: #{tpu_custom_call.1} parent=39 // pred_fallthru
          _
        // Predicated region
        $region45: #{tpu_custom_call.1} parent=39 // pred_check
          %p230 = pneg %p128
        $region46: #{tpu_custom_call.1} parent=39 // pred_check_branch
          %232 = sbr.rel (%p230) target = $region48
        $region47: #{tpu_custom_call.1} parent=39 // pred_region
          %233 = dma.done [#allocation5], 16
        $region48: #{tpu_custom_call.1} parent=39 // pred_fallthru
          _
        %234 = sfence
        %s235 = sand.u32 %s31, 1
        %s236 = scalar_lea.sflag [#allocation3], %s235
        %s237 = sand.u32 %s31, 1
        %s238 = smul.addr %s237, 32
        %s239 = scalar_lea.vmem [#allocation2], %s238
        %p240 = pneg %p44
        %p241 = pneg %p41
        %p242 = pneg %p65
        %p243 = pneg %p62
        %p244 = pneg %p86
        %p245 = pneg %p83
        %p246 = pneg %p107
        %p247 = pneg %p104
        %p248 = pneg %p128
        %p249 = pneg %p125
        %p250 = pneg %p154
        %p251 = pneg %p151
        %s252 = sand.u32 %s141, 1
        %s253 = scalar_lea.sflag [#allocation4], %s252
        %s254 = sand.u32 %s141, 1
        %s255 = smul.addr %s254, 32
        %s256 = scalar_lea.vmem [#allocation7], %s255
        %v257 = vld [vmem:[%s225] sm:$0xff]
        %v258 = vld [vmem:[%s225 + $0x8] sm:$0xff]
        %v259 = vld [vmem:[%s225 + $0x10] sm:$0xff]
        %v260 = vld [vmem:[%s225 + $0x18] sm:$0xff]
        %s261 = sld [smem:[#allocation6]]
        %s262 = sld [smem:[#allocation6 + $0x1]]
        %s263 = sld [smem:[#allocation6 + $0x2]]
        %v264 = vadd.f32 %v257, %v258
        %265 = vadd.xlane.f32.xlu0 %v264
        %v266 = vpop.xlane.xlu0 %265
        %v267 = vadd.f32 %v259, %v260
        %268 = vadd.xlane.f32.xlu0 %v267
        %v269 = vpop.xlane.xlu0 %268
        %v270 = vstv %s261
        %v271 = vmul.f32 %v266, %v270
        %v272 = vmul.f32 %v269, %v270
        %v273 = vld [vmem:[%s1] sm:$0xff]
        %v274 = vld [vmem:[%s1 + $0x8] sm:$0xff]
        %v277 = vlaneseq
        %v278 = vand.u32 %v277, 127
        %v279 = vlaneseq
        %v280 = vshrl.u32 %v279, 7
        %v281 = vsub.s32 %v278, %v280
        %v282 = vrot.slane %v271, %v281
        %v283 = vadd.s32 %v278, 4294967288
        %v284 = vlaneseq
        %v285 = vshrl.u32 %v284, 7
        %v286 = vsub.s32 %v283, %v285
        %v287 = vrot.slane %v272, %v286
        %vm288 = vcmask 130112
        %v289 = vsel %vm288, %v287, %v282
        %vm290 = vcmask 130048
        %v291 = vsel %vm290, %v289, 0
        %293 = vmatprep.subr.mxu0 0.0
        %294 = vmatpush1.msra.mxu0 %v273
        %295 = vmatprep.subr.mxu0 0.0
        %296 = vmatpush1.msra.mxu0 %v274
        %297 = vmatprep.subr.mxu0 0.0
        %298 = vmatpush1.msra.mxu0 0.0
        %299 = vmatprep.subr.mxu0 0.0
        %300 = vmatpush1.msra.mxu0 0.0
        %301 = vmatprep.subr.mxu0 0.0
        %302 = vmatpush1.msra.mxu0 0.0
        %303 = vmatprep.subr.mxu0 0.0
        %304 = vmatpush1.msra.mxu0 0.0
        %305 = vmatprep.subr.mxu0 0.0
        %306 = vmatpush1.msra.mxu0 0.0
        %307 = vmatprep.subr.mxu0 0.0
        %308 = vmatpush1.msra.mxu0 0.0
        %309 = vmatprep.subr.mxu0 0.0
        %310 = vmatpush1.msra.mxu0 0.0
        %311 = vmatprep.subr.mxu0 0.0
        %312 = vmatpush1.msra.mxu0 0.0
        %313 = vmatprep.subr.mxu0 0.0
        %314 = vmatpush1.msra.mxu0 0.0
        %315 = vmatprep.subr.mxu0 0.0
        %316 = vmatpush1.msra.mxu0 0.0
        %317 = vmatprep.subr.mxu0 0.0
        %318 = vmatpush1.msra.mxu0 0.0
        %319 = vmatprep.subr.mxu0 0.0
        %320 = vmatpush1.msra.mxu0 0.0
        %321 = vmatprep.subr.mxu0 0.0
        %322 = vmatpush1.msra.mxu0 0.0
        %323 = vmatprep.subr.mxu0 0.0
        %324 = vmatpush1.msra.mxu0 0.0
        %325 = vmatprep.subr.mxu0 0.0
        %326 = vmatpush1.msra.mxu0 0.0
        %327 = vmatprep.subr.mxu0 0.0
        %328 = vmatpush1.msra.mxu0 0.0
        %329 = vmatprep.subr.mxu0 0.0
        %330 = vmatpush1.msra.mxu0 0.0
        %331 = vmatprep.subr.mxu0 0.0
        %332 = vmatpush1.msra.mxu0 0.0
        %333 = vmatprep.subr.mxu0 0.0
        %334 = vmatpush1.msra.mxu0 0.0
        %335 = vmatprep.subr.mxu0 0.0
        %336 = vmatpush1.msra.mxu0 0.0
        %337 = vmatprep.subr.mxu0 0.0
        %338 = vmatpush1.msra.mxu0 0.0
        %339 = vmatprep.subr.mxu0 0.0
        %340 = vmatpush1.msra.mxu0 0.0
        %341 = vmatprep.subr.mxu0 0.0
        %342 = vmatpush1.msra.mxu0 0.0
        %343 = vmatprep.subr.mxu0 0.0
        %344 = vmatpush1.msra.mxu0 0.0
        %345 = vmatprep.subr.mxu0 0.0
        %346 = vmatpush1.msra.mxu0 0.0
        %347 = vmatprep.subr.mxu0 0.0
        %348 = vmatpush1.msra.mxu0 0.0
        %349 = vmatprep.subr.mxu0 0.0
        %350 = vmatpush1.msra.mxu0 0.0
        %351 = vmatprep.subr.mxu0 0.0
        %352 = vmatpush1.msra.mxu0 0.0
        %353 = vmatprep.subr.mxu0 0.0
        %354 = vmatpush1.msra.mxu0 0.0
        %355 = vmatprep.subr.mxu0 0.0
        %356 = vmatpush1.msra.mxu0 0.0
        %357 = vmatprep.mubr.f32.mxu0 0.0
        %358 = vmatmul.mubr.f32.gmra.mrb[0].mxu0 %v291
        %v359 = vpop.f32.mrb[0].mxu0
        %v360 = vadd.f32 0.0, %v359
        %v361 = vpop.f32.mrb[0].mxu0
        %362 = vdwg.mxu0
        %v363 = vstv %s262
        %v364 = vmul.f32 %v363, %v360
        %vm365 = vcmask 24576
        %v366 = vsel %vm365, %v364, -inf
        %367 = vmax.xlane.f32.xlu0 %v366
        %v368 = vpop.xlane.xlu0 %367
        %v369 = vsub.f32 %v364, %v368
        %v370 = vmul.f32 %v369, 1.442695
        %v371 = vpow.pop %v370
        %v372 = vsel %vm365, %v371, 0.0
        %373 = vadd.xlane.f32.xlu0 %v372
        %v374 = vpop.xlane.xlu0 %373
        %v375 = vrcp.pop %v374
        %v376 = vmul.f32 %v371, %v375
        %v377 = vmul.f32 %v376, %v360
        %v378 = vld [vmem:[%s2] sm:$0xf]
        %vm379 = vcmask 31744
        %v381 = vsel %vm379, %v360, 0
        %vm383 = vcmask 1043456
        %v385 = vsel %vm383, %v378, 0
        %387 = vmatprep.subr.mxu0 0.0
        %388 = vmatpush1.msra.mxu0 %v385
        %389 = vmatprep.subr.mxu0 0.0
        %390 = vmatpush1.msra.mxu0 0.0
        %391 = vmatprep.subr.mxu0 0.0
        %392 = vmatpush1.msra.mxu0 0.0
        %393 = vmatprep.subr.mxu0 0.0
        %394 = vmatpush1.msra.mxu0 0.0
        %395 = vmatprep.subr.mxu0 0.0
        %396 = vmatpush1.msra.mxu0 0.0
        %397 = vmatprep.subr.mxu0 0.0
        %398 = vmatpush1.msra.mxu0 0.0
        %399 = vmatprep.subr.mxu0 0.0
        %400 = vmatpush1.msra.mxu0 0.0
        %401 = vmatprep.subr.mxu0 0.0
        %402 = vmatpush1.msra.mxu0 0.0
        %403 = vmatprep.subr.mxu0 0.0
        %404 = vmatpush1.msra.mxu0 0.0
        %405 = vmatprep.subr.mxu0 0.0
        %406 = vmatpush1.msra.mxu0 0.0
        %407 = vmatprep.subr.mxu0 0.0
        %408 = vmatpush1.msra.mxu0 0.0
        %409 = vmatprep.subr.mxu0 0.0
        %410 = vmatpush1.msra.mxu0 0.0
        %411 = vmatprep.subr.mxu0 0.0
        %412 = vmatpush1.msra.mxu0 0.0
        %413 = vmatprep.subr.mxu0 0.0
        %414 = vmatpush1.msra.mxu0 0.0
        %415 = vmatprep.subr.mxu0 0.0
        %416 = vmatpush1.msra.mxu0 0.0
        %417 = vmatprep.subr.mxu0 0.0
        %418 = vmatpush1.msra.mxu0 0.0
        %419 = vmatprep.subr.mxu0 0.0
        %420 = vmatpush1.msra.mxu0 0.0
        %421 = vmatprep.subr.mxu0 0.0
        %422 = vmatpush1.msra.mxu0 0.0
        %423 = vmatprep.subr.mxu0 0.0
        %424 = vmatpush1.msra.mxu0 0.0
        %425 = vmatprep.subr.mxu0 0.0
        %426 = vmatpush1.msra.mxu0 0.0
        %427 = vmatprep.subr.mxu0 0.0
        %428 = vmatpush1.msra.mxu0 0.0
        %429 = vmatprep.subr.mxu0 0.0
        %430 = vmatpush1.msra.mxu0 0.0
        %431 = vmatprep.subr.mxu0 0.0
        %432 = vmatpush1.msra.mxu0 0.0
        %433 = vmatprep.subr.mxu0 0.0
        %434 = vmatpush1.msra.mxu0 0.0
        %435 = vmatprep.subr.mxu0 0.0
        %436 = vmatpush1.msra.mxu0 0.0
        %437 = vmatprep.subr.mxu0 0.0
        %438 = vmatpush1.msra.mxu0 0.0
        %439 = vmatprep.subr.mxu0 0.0
        %440 = vmatpush1.msra.mxu0 0.0
        %441 = vmatprep.subr.mxu0 0.0
        %442 = vmatpush1.msra.mxu0 0.0
        %443 = vmatprep.subr.mxu0 0.0
        %444 = vmatpush1.msra.mxu0 0.0
        %445 = vmatprep.subr.mxu0 0.0
        %446 = vmatpush1.msra.mxu0 0.0
        %447 = vmatprep.subr.mxu0 0.0
        %448 = vmatpush1.msra.mxu0 0.0
        %449 = vmatprep.subr.mxu0 0.0
        %450 = vmatpush1.msra.mxu0 0.0
        %451 = vmatprep.mubr.f32.mxu0 0.0
        %452 = vmatmul.mubr.f32.gmra.mrb[0].mxu0 %v381
        %v453 = vpop.f32.mrb[0].mxu0
        %v454 = vadd.f32 0.0, %v453
        %v455 = vpop.f32.mrb[0].mxu0
        %456 = vdwg.mxu0
        %v457 = vadd.f32 %v377, %v454
        %v458 = vstv %s263
        %v459 = vmul.f32 %v458, %v457
        %v460 = vmax.f32 %v459, 0.0
        %v461 = vld [vmem:[%s3] sm:$0xf]
        %v463 = vsel %vm379, %v460, 0
        %v466 = vsel %vm383, %v461, 0
        %468 = vmatprep.subr.mxu0 0.0
        %469 = vmatpush1.msra.mxu0 %v466
        %470 = vmatprep.subr.mxu0 0.0
        %471 = vmatpush1.msra.mxu0 0.0
        %472 = vmatprep.subr.mxu0 0.0
        %473 = vmatpush1.msra.mxu0 0.0
        %474 = vmatprep.subr.mxu0 0.0
        %475 = vmatpush1.msra.mxu0 0.0
        %476 = vmatprep.subr.mxu0 0.0
        %477 = vmatpush1.msra.mxu0 0.0
        %478 = vmatprep.subr.mxu0 0.0
        %479 = vmatpush1.msra.mxu0 0.0
        %480 = vmatprep.subr.mxu0 0.0
        %481 = vmatpush1.msra.mxu0 0.0
        %482 = vmatprep.subr.mxu0 0.0
        %483 = vmatpush1.msra.mxu0 0.0
        %484 = vmatprep.subr.mxu0 0.0
        %485 = vmatpush1.msra.mxu0 0.0
        %486 = vmatprep.subr.mxu0 0.0
        %487 = vmatpush1.msra.mxu0 0.0
        %488 = vmatprep.subr.mxu0 0.0
        %489 = vmatpush1.msra.mxu0 0.0
        %490 = vmatprep.subr.mxu0 0.0
        %491 = vmatpush1.msra.mxu0 0.0
        %492 = vmatprep.subr.mxu0 0.0
        %493 = vmatpush1.msra.mxu0 0.0
        %494 = vmatprep.subr.mxu0 0.0
        %495 = vmatpush1.msra.mxu0 0.0
        %496 = vmatprep.subr.mxu0 0.0
        %497 = vmatpush1.msra.mxu0 0.0
        %498 = vmatprep.subr.mxu0 0.0
        %499 = vmatpush1.msra.mxu0 0.0
        %500 = vmatprep.subr.mxu0 0.0
        %501 = vmatpush1.msra.mxu0 0.0
        %502 = vmatprep.subr.mxu0 0.0
        %503 = vmatpush1.msra.mxu0 0.0
        %504 = vmatprep.subr.mxu0 0.0
        %505 = vmatpush1.msra.mxu0 0.0
        %506 = vmatprep.subr.mxu0 0.0
        %507 = vmatpush1.msra.mxu0 0.0
        %508 = vmatprep.subr.mxu0 0.0
        %509 = vmatpush1.msra.mxu0 0.0
        %510 = vmatprep.subr.mxu0 0.0
        %511 = vmatpush1.msra.mxu0 0.0
        %512 = vmatprep.subr.mxu0 0.0
        %513 = vmatpush1.msra.mxu0 0.0
        %514 = vmatprep.subr.mxu0 0.0
        %515 = vmatpush1.msra.mxu0 0.0
        %516 = vmatprep.subr.mxu0 0.0
        %517 = vmatpush1.msra.mxu0 0.0
        %518 = vmatprep.subr.mxu0 0.0
        %519 = vmatpush1.msra.mxu0 0.0
        %520 = vmatprep.subr.mxu0 0.0
        %521 = vmatpush1.msra.mxu0 0.0
        %522 = vmatprep.subr.mxu0 0.0
        %523 = vmatpush1.msra.mxu0 0.0
        %524 = vmatprep.subr.mxu0 0.0
        %525 = vmatpush1.msra.mxu0 0.0
        %526 = vmatprep.subr.mxu0 0.0
        %527 = vmatpush1.msra.mxu0 0.0
        %528 = vmatprep.subr.mxu0 0.0
        %529 = vmatpush1.msra.mxu0 0.0
        %530 = vmatprep.subr.mxu0 0.0
        %531 = vmatpush1.msra.mxu0 0.0
        %532 = vmatprep.mubr.f32.mxu0 0.0
        %533 = vmatmul.mubr.f32.gmra.mrb[0].mxu0 %v463
        %v534 = vpop.f32.mrb[0].mxu0
        %v535 = vadd.f32 0.0, %v534
        %v536 = vpop.f32.mrb[0].mxu0
        %537 = vdwg.mxu0
        %v538 = vxor.u32 %v535, 2147483648
        %v539 = vmul.f32 %v538, 1.442695
        %v540 = vpow.pop %v539
        %v541 = vadd.f32 %v540, 1.0
        %v542 = vrcp.pop %v541
        %v543 = vmul.f32 1.0, %v542
        %v544 = vlaneseq
        %v545 = vshrl.u32 %v544, 7
        %v546 = vsub.s32 0, %v545
        %v547 = vrot.slane %v543, %v546
        %549 = vbcast.lane.b32.xlu0 %v547, 256
        %v550 = vpop.permute.xlu0 %549
        %s552 = sor.u32 256, 8
        %553 = vbcast.lane.b32.xlu0 %v547, %s552
        %v554 = vpop.permute.xlu0 %553
        %v555 = vmul.f32 %v257, %v550
        %v556 = vmul.f32 %v258, %v550
        %v557 = vmul.f32 %v259, %v554
        %v558 = vmul.f32 %v260, %v554
        %559 = vst [vmem:[%s256] sm:$0xff] %v555
        %560 = vst [vmem:[%s256 + $0x8] sm:$0xff] %v556
        %561 = vst [vmem:[%s256 + $0x10] sm:$0xff] %v557
        %562 = vst [vmem:[%s256 + $0x18] sm:$0xff] %v558
        %s563 = sand.u32 %s141, 1
        %s564 = scalar_lea.sflag [#allocation4], %s563
        %s565 = sand.u32 %s141, 1
        %s566 = smul.addr %s565, 32
        %s567 = scalar_lea.vmem [#allocation7], %s566
        // Predicated region
        $region49: #{tpu_custom_call.1} parent=39 // pred_check
          %p568 = pneg %p151
        $region50: #{tpu_custom_call.1} parent=39 // pred_check_branch
          %570 = sbr.rel (%p568) target = $region52
        $region51: #{tpu_custom_call.1} parent=39 // pred_region
          %s572 = ssub.s32 512, 512
          %573 = vsyncadd %s564, %s572
          %s574 = smul.addr %s23, 4
          %s575 = smul.addr %s574, 128
          %s576 = scalar_lea.hbm %s5, %s575
          %s577 = sshll.u32 %s567, 4
          %s578 = int_to_ptr.vmem [resolvable:$true] %s577
          %583 = dma.vmem_to_hbm [thread:$0]  %s578, 512, %s576, %s564, 256, 256, 16
        $region52: #{tpu_custom_call.1} parent=39 // pred_fallthru
          _
      $region40: #{tpu_custom_call.1} parent=5 // pred_fallthru
        _
      %p584 = scmp.le.s32.totalorder 2, %s18
      // Predicated region
      $region53: #{tpu_custom_call.1} parent=5 // pred_check
        %p585 = pneg %p584
      $region54: #{tpu_custom_call.1} parent=5 // pred_check_branch
        %587 = sbr.rel (%p585) target = $region56
      $region55: #{tpu_custom_call.1} parent=5 // pred_region
        %s588 = ssub.s32 %s18, 2
        // Predicated region
        $region57: #{tpu_custom_call.1} parent=55 // pred_check
          %p589 = pneg %p157
        $region58: #{tpu_custom_call.1} parent=55 // pred_check_branch
          %591 = sbr.rel (%p589) target = $region60
        $region59: #{tpu_custom_call.1} parent=55 // pred_region
          %s592 = sand.u32 %s142, 1
          %s593 = scalar_lea.sflag [#allocation4], %s592
          %s594 = sand.u32 %s142, 1
          %s595 = smul.addr %s594, 32
          %s596 = scalar_lea.vmem [#allocation7], %s595
          %597 = dma.done %s593, 512
        $region60: #{tpu_custom_call.1} parent=55 // pred_fallthru
          _
      $region56: #{tpu_custom_call.1} parent=5 // pred_fallthru
        _
    $region6: #{tpu_custom_call.1} parent=1 // loop_footer
      %s22 = sadd.s32 1, %s18
    $region7: #{tpu_custom_call.1} parent=1 // loop_footer_branch
      %17 = sbr.rel target = $region3
    $region8: #{tpu_custom_call.1} parent=1 // loop_exit
      _
    %598 = vsyncpa [#allocation3], 1
    %s599 = scalar_lea.sflag [#allocation3], 1
    %600 = vsyncpa %s599, 1
    %601 = vsyncpa [#allocation4], 1
    %s602 = scalar_lea.sflag [#allocation4], 1
    %603 = vsyncpa %s602, 1
    %604 = vsyncpa [#allocation5], 1
    %s605 = scalar_lea.sflag [#allocation5], 1
    %606 = vsyncpa %s605, 1

</llo_original>
